<compile_context>
chip_gen: v7x
topology: tpu7x:2x2x1
jax: 0.10.0
libtpu: 0.0.40
codegen_flags: <defaults>
</compile_context>

<pallas_src>
import functools

import jax
import jax.numpy as jnp
from jax.experimental import pallas as pl
from jax.experimental.pallas import tpu as pltpu

_LANES = 128


def _round_up(x: int, m: int) -> int:
    return ((x + m - 1) // m) * m


def _cdiv(a: int, b: int) -> int:
    return -(-a // b)


def _reg_rank_loss_kernel(margin_ref, p0_ref, p1_ref, t0_ref, t1_ref,
                          sq_out_ref, rank_out_ref, *,
                          tiles_per_split, num_tiles, valid_in_last,
                          needs_mask, guard_extra):
    step = pl.program_id(1)
    gtile = pl.program_id(0) * tiles_per_split + step

    # Output blocks double as per-split vector accumulators (revisited across the
    # "arbitrary" axis): init on the first step of each split.
    @pl.when(step == 0)
    def _init():
        sq_out_ref[...] = jnp.zeros_like(sq_out_ref)
        rank_out_ref[...] = jnp.zeros_like(rank_out_ref)

    margin = margin_ref[0]

    def _accumulate(mask_tail):
        p0 = p0_ref[...].astype(jnp.float32)
        p1 = p1_ref[...].astype(jnp.float32)
        t0 = t0_ref[...].astype(jnp.float32)
        t1 = t1_ref[...].astype(jnp.float32)

        # Regression term: (p0 - t0)^2 + (p1 - t1)^2.
        d0 = p0 - t0
        d1 = p1 - t1
        sq = d0 * d0 + d1 * d1

        # Rank term: target = +1 except -1 where t0 < t1 (ties -> +1, as in PyTorch);
        # F.margin_ranking_loss elementwise term = max(0, -target*(p0-p1) + margin).
        target = jnp.where(t0 < t1, jnp.float32(-1.0), jnp.float32(1.0))
        rank = jnp.maximum(jnp.float32(0.0), margin - target * (p0 - p1))

        if mask_tail:
            # Last tile only: mask the zero-padded tail and any unspecified rows
            # from a ragged grid block.  jnp.where (not multiply) so garbage
            # NaN/Inf cannot leak into the sums.
            row = jax.lax.broadcasted_iota(jnp.int32, sq.shape, 0)
            lane = jax.lax.broadcasted_iota(jnp.int32, sq.shape, 1)
            valid = row * sq.shape[1] + lane < valid_in_last
            sq = jnp.where(valid, sq, jnp.float32(0.0))
            rank = jnp.where(valid, rank, jnp.float32(0.0))

        # Pure vreg-wise adds into the (8, 128) accumulators; no cross-lane reduce.
        sq_out_ref[...] += sq.reshape(-1, 8, sq.shape[1]).sum(axis=0)
        rank_out_ref[...] += rank.reshape(-1, 8, rank.shape[1]).sum(axis=0)

    if needs_mask:
        @pl.when(gtile < num_tiles - 1)
        def _steady():
            _accumulate(False)

        @pl.when(gtile == num_tiles - 1)
        def _tail():
            _accumulate(True)
    elif guard_extra:
        # Grid has a few duplicate (clamped) tiles past the end: skip them.
        @pl.when(gtile < num_tiles)
        def _steady():
            _accumulate(False)
    else:
        _accumulate(False)


def _reference(y_pred, y_true, margin):
    p0, p1 = (jnp.asarray(x, jnp.float32) for x in y_pred)
    t0, t1 = (jnp.asarray(x, jnp.float32) for x in y_true)
    loss_reg = (jnp.mean((p0 - t0) ** 2) + jnp.mean((p1 - t1) ** 2)) / 2.0
    target = jnp.where(t0 < t1, -1.0, 1.0)
    loss_rank = jnp.mean(jnp.maximum(0.0, -target * (p0 - p1) + margin))
    return loss_reg + loss_rank, loss_reg, loss_rank


def reg_rank_loss(y_pred, y_true, margin: float, *,
                  max_tile_rows: int = 2048,
                  num_splits: int = 1,
                  force_pallas: bool = False,
                  min_pallas_elems: int = 1 << 16):
    """Pallas implementation of RegRankLoss.forward.

    Args:
      y_pred: tuple (p0, p1), each shape (B, 1) (or (B,)).
      y_true: tuple (t0, t1), same shapes as y_pred.
      margin: ranking-loss margin (runtime value, passed via SMEM -> no recompile).
      max_tile_rows: rows per tile cap (rows x 128 lanes per input block).
      num_splits: number of independent reduction splits (set 2 on v7x megacore).
      force_pallas: skip the small-batch jnp fast path (used for testing).
      min_pallas_elems: below this element count, use the fused-XLA fast path.

    Returns:
      (loss, loss_reg, loss_rank) as float32 scalars.
    """
    p0, p1 = y_pred
    t0, t1 = y_true
    assert p0.shape == p1.shape == t0.shape == t1.shape
    n_valid = int(p0.size)
    assert n_valid > 0

    # Small-B fast path: launch + layout overhead dominates; plain XLA wins.
    if not force_pallas and n_valid < min_pallas_elems:
        return _reference(y_pred, y_true, margin)

    dtype = jnp.result_type(p0, p1, t0, t1)
    itemsize = jnp.dtype(dtype).itemsize
    sub = max(8, 32 // itemsize)                    # sublane multiple: 8/16/32

    rows = _cdiv(n_valid, _LANES)
    padded_rows = _round_up(rows, sub)              # minimal padding only
    padded_elems = padded_rows * _LANES

    max_rows = max(sub, (int(max_tile_rows) // sub) * sub)
    tile_rows = min(max_rows, padded_rows)
    num_tiles = _cdiv(padded_rows, tile_rows)

    num_splits = max(1, min(int(num_splits), num_tiles))
    tiles_per_split = _cdiv(num_tiles, num_splits)
    guard_extra = num_splits * tiles_per_split != num_tiles

    needs_mask = (padded_elems != n_valid) or (padded_rows % tile_rows != 0)
    valid_in_last = n_valid - (num_tiles - 1) * tile_rows * _LANES

    def _prep(x):
        x = jnp.ravel(x).astype(dtype)              # native dtype, no f32 upcast
        if padded_elems != n_valid:
            x = jnp.pad(x, (0, padded_elems - n_valid))
        return x.reshape(padded_rows, _LANES)

    p0r, p1r, t0r, t1r = (_prep(x) for x in (p0, p1, t0, t1))
    margin_arr = jnp.array([margin], dtype=jnp.float32)

    kernel = functools.partial(
        _reg_rank_loss_kernel,
        tiles_per_split=tiles_per_split,
        num_tiles=num_tiles,
        valid_in_last=valid_in_last,
        needs_mask=needs_mask,
        guard_extra=guard_extra,
    )

    if guard_extra:
        def in_map(s, i):
            return (jnp.minimum(s * tiles_per_split + i, num_tiles - 1), 0)
    else:
        def in_map(s, i):
            return (s * tiles_per_split + i, 0)

    tile_spec = pl.BlockSpec((tile_rows, _LANES), in_map)
    out_spec = pl.BlockSpec((8, _LANES), lambda s, i: (s, 0))

    cost = pl.CostEstimate(
        flops=10 * padded_elems,
        transcendentals=0,
        bytes_accessed=4 * padded_elems * itemsize + 2 * num_splits * 8 * _LANES * 4,
    )

    sq_parts, rank_parts = pl.pallas_call(
        kernel,
        out_shape=(
            jax.ShapeDtypeStruct((num_splits * 8, _LANES), jnp.float32),
            jax.ShapeDtypeStruct((num_splits * 8, _LANES), jnp.float32),
        ),
        grid_spec=pltpu.PrefetchScalarGridSpec(
            num_scalar_prefetch=0,
            grid=(num_splits, tiles_per_split),
            in_specs=[
                pl.BlockSpec(memory_space=pltpu.SMEM),   # [margin]
                tile_spec, tile_spec, tile_spec, tile_spec,
            ],
            out_specs=[out_spec, out_spec],
        ),
        compiler_params=pltpu.CompilerParams(
            dimension_semantics=("parallel", "arbitrary")),
        cost_estimate=cost,
    )(margin_arr, p0r, p1r, t0r, t1r)

    # Final cross-lane reduce + 1/N scaling on a tiny array, in the wrapper.
    inv_n = jnp.float32(1.0 / n_valid)
    loss_reg = jnp.float32(0.5) * inv_n * jnp.sum(sq_parts)
    loss_rank = inv_n * jnp.sum(rank_parts)
    return loss_reg + loss_rank, loss_reg, loss_rank


def _check(y_pred, y_true, margin, **kw):
    got = reg_rank_loss(y_pred, y_true, margin, **kw)
    jax.block_until_ready(got)
    want = _reference(y_pred, y_true, margin)
    for g, w in zip(got, want):
        assert jnp.allclose(g, w, atol=1e-5, rtol=1e-4), (g, w)


if __name__ == "__main__":
    key = jax.random.PRNGKey(0)
    margin = 0.1

    # 1) Small shape consistent with the module's per-sample scalar scores: (B, 1).
    B = 8
    k0, k1, k2, k3 = jax.random.split(key, 4)
    p0 = jax.random.normal(k0, (B, 1), dtype=jnp.float32)
    p1 = jax.random.normal(k1, (B, 1), dtype=jnp.float32)
    t0 = jax.random.normal(k2, (B, 1), dtype=jnp.float32)
    t1 = jax.random.normal(k3, (B, 1), dtype=jnp.float32)
    _check((p0, p1), (t0, t1), margin, force_pallas=True)

    # 2) Multi-tile + 2-way split + ragged/padded tail:
    #    B = 3000 -> 24 rows, 8-row tiles -> 3 tiles over a (2, 2) grid.
    B2 = 3000
    k4, k5, k6, k7 = jax.random.split(jax.random.PRNGKey(1), 4)
    q0 = jax.random.normal(k4, (B2, 1), dtype=jnp.float32)
    q1 = jax.random.normal(k5, (B2, 1), dtype=jnp.float32)
    s0 = jax.random.normal(k6, (B2, 1), dtype=jnp.float32)
    s1 = jax.random.normal(k7, (B2, 1), dtype=jnp.float32)
    _check((q0, q1), (s0, s1), margin,
           force_pallas=True, max_tile_rows=8, num_splits=2)

    # 3) Native bf16 feed (16-row sublane rounding, masked tail).
    B3 = 1000
    k8, k9, ka, kb = jax.random.split(jax.random.PRNGKey(2), 4)
    r0 = jax.random.normal(k8, (B3, 1), dtype=jnp.bfloat16)
    r1 = jax.random.normal(k9, (B3, 1), dtype=jnp.bfloat16)
    u0 = jax.random.normal(ka, (B3, 1), dtype=jnp.bfloat16)
    u1 = jax.random.normal(kb, (B3, 1), dtype=jnp.bfloat16)
    _check((r0, r1), (u0, u1), margin, force_pallas=True)

    # 4) Small-B fast path (plain jnp) — same semantics.
    _check((p0, p1), (t0, t1), margin)

    print("KERNEL_OK")
</pallas_src>

<mosaic_0001>
module attributes {stable_mosaic.version = 11 : i64} {
  func.func @_reg_rank_loss_kernel(%arg0: i32, %arg1: i32, %arg2: memref<1xf32, #tpu.memory_space<smem>>, %arg3: memref<8x128xf32, #tpu.memory_space<vmem>>, %arg4: memref<8x128xf32, #tpu.memory_space<vmem>>, %arg5: memref<8x128xf32, #tpu.memory_space<vmem>>, %arg6: memref<8x128xf32, #tpu.memory_space<vmem>>, %arg7: memref<8x128xf32, #tpu.memory_space<vmem>>, %arg8: memref<8x128xf32, #tpu.memory_space<vmem>>) attributes {dimension_semantics = [#tpu.dimension_semantics<parallel>, #tpu.dimension_semantics<arbitrary>], iteration_bounds = array<i64: 1, 1>, scalar_prefetch = 0 : i64, scratch_operands = 0 : i64, tpu.core_type = #tpu.core_type<tc>, window_params = [{transform_indices = @transform_0, window_bounds = array<i64: 1>}, {transform_indices = @transform_1, window_bounds = array<i64: 8, 128>}, {transform_indices = @transform_2, window_bounds = array<i64: 8, 128>}, {transform_indices = @transform_3, window_bounds = array<i64: 8, 128>}, {transform_indices = @transform_4, window_bounds = array<i64: 8, 128>}, {transform_indices = @transform_5, window_bounds = array<i64: 8, 128>}, {transform_indices = @transform_6, window_bounds = array<i64: 8, 128>}]} {
    %c1_i32 = arith.constant 1 : i32
    %0 = arith.muli %arg0, %c1_i32 : i32
    %1 = arith.addi %0, %arg1 : i32
    %c0_i32 = arith.constant 0 : i32
    %2 = arith.cmpi eq, %arg1, %c0_i32 : i32
    %3 = arith.extui %2 : i1 to i32
    %c0_i32_0 = arith.constant 0 : i32
    %4 = arith.cmpi ne, %3, %c0_i32_0 : i32
    scf.if %4 {
      %cst = arith.constant 0.000000e+00 : f32
      %12 = vector.broadcast %cst : f32 to vector<8x128xf32>
      %c0_5 = arith.constant 0 : index
      %c0_6 = arith.constant 0 : index
      %13 = vector.load %arg7[%c0_5, %c0_6] : memref<8x128xf32, #tpu.memory_space<vmem>>, vector<8x128xf32>
      tpu.vector_store %arg7[%c0_5, %c0_6], %12 {strides = array<i32>} : memref<8x128xf32, #tpu.memory_space<vmem>>, vector<8x128xf32>,
      %cst_7 = arith.constant 0.000000e+00 : f32
      %14 = vector.broadcast %cst_7 : f32 to vector<8x128xf32>
      %c0_8 = arith.constant 0 : index
      %c0_9 = arith.constant 0 : index
      %15 = vector.load %arg8[%c0_8, %c0_9] : memref<8x128xf32, #tpu.memory_space<vmem>>, vector<8x128xf32>
      tpu.vector_store %arg8[%c0_8, %c0_9], %14 {strides = array<i32>} : memref<8x128xf32, #tpu.memory_space<vmem>>, vector<8x128xf32>,
    } else {
    }
    %c0 = arith.constant 0 : index
    %5 = memref.load %arg2[%c0] : memref<1xf32, #tpu.memory_space<smem>>
    %c0_i32_1 = arith.constant 0 : i32
    %6 = arith.cmpi slt, %1, %c0_i32_1 : i32
    %7 = arith.extui %6 : i1 to i32
    %c0_i32_2 = arith.constant 0 : i32
    %8 = arith.cmpi ne, %7, %c0_i32_2 : i32
    scf.if %8 {
      %c0_5 = arith.constant 0 : index
      %c0_6 = arith.constant 0 : index
      %12 = vector.load %arg3[%c0_5, %c0_6] : memref<8x128xf32, #tpu.memory_space<vmem>>, vector<8x128xf32>
      %c0_7 = arith.constant 0 : index
      %c0_8 = arith.constant 0 : index
      %13 = vector.load %arg4[%c0_7, %c0_8] : memref<8x128xf32, #tpu.memory_space<vmem>>, vector<8x128xf32>
      %c0_9 = arith.constant 0 : index
      %c0_10 = arith.constant 0 : index
      %14 = vector.load %arg5[%c0_9, %c0_10] : memref<8x128xf32, #tpu.memory_space<vmem>>, vector<8x128xf32>
      %c0_11 = arith.constant 0 : index
      %c0_12 = arith.constant 0 : index
      %15 = vector.load %arg6[%c0_11, %c0_12] : memref<8x128xf32, #tpu.memory_space<vmem>>, vector<8x128xf32>
      %16 = arith.subf %12, %14 : vector<8x128xf32>
      %17 = arith.subf %13, %15 : vector<8x128xf32>
      %18 = arith.mulf %16, %16 : vector<8x128xf32>
      %19 = arith.mulf %17, %17 : vector<8x128xf32>
      %20 = arith.addf %18, %19 : vector<8x128xf32>
      %21 = arith.cmpf olt, %14, %15 : vector<8x128xf32>
      %cst = arith.constant -1.000000e+00 : f32
      %cst_13 = arith.constant 1.000000e+00 : f32
      %22 = vector.broadcast %cst : f32 to vector<8x128xf32>
      %23 = vector.broadcast %cst_13 : f32 to vector<8x128xf32>
      %24 = arith.select %21, %22, %23 : vector<8x128xi1>, vector<8x128xf32>
      %25 = arith.subf %12, %13 : vector<8x128xf32>
      %26 = arith.mulf %24, %25 : vector<8x128xf32>
      %27 = vector.broadcast %5 : f32 to vector<8x128xf32>
      %28 = arith.subf %27, %26 : vector<8x128xf32>
      %cst_14 = arith.constant 0.000000e+00 : f32
      %29 = vector.broadcast %cst_14 : f32 to vector<8x128xf32>
      %30 = arith.maximumf %29, %28 : vector<8x128xf32>
      %c0_15 = arith.constant 0 : index
      %c0_16 = arith.constant 0 : index
      %31 = vector.load %arg7[%c0_15, %c0_16] : memref<8x128xf32, #tpu.memory_space<vmem>>, vector<8x128xf32>
      %32 = vector.shape_cast %20 : vector<8x128xf32> to vector<1x8x128xf32>
      %cst_17 = arith.constant dense<0.000000e+00> : vector<8x128xf32>
      %33 = vector.multi_reduction <add>, %32, %cst_17 [0] : vector<1x8x128xf32> to vector<8x128xf32>
      %34 = arith.addf %31, %33 : vector<8x128xf32>
      %c0_18 = arith.constant 0 : index
      %c0_19 = arith.constant 0 : index
      %35 = vector.load %arg7[%c0_18, %c0_19] : memref<8x128xf32, #tpu.memory_space<vmem>>, vector<8x128xf32>
      tpu.vector_store %arg7[%c0_18, %c0_19], %34 {strides = array<i32>} : memref<8x128xf32, #tpu.memory_space<vmem>>, vector<8x128xf32>,
      %c0_20 = arith.constant 0 : index
      %c0_21 = arith.constant 0 : index
      %36 = vector.load %arg8[%c0_20, %c0_21] : memref<8x128xf32, #tpu.memory_space<vmem>>, vector<8x128xf32>
      %37 = vector.shape_cast %30 : vector<8x128xf32> to vector<1x8x128xf32>
      %cst_22 = arith.constant dense<0.000000e+00> : vector<8x128xf32>
      %38 = vector.multi_reduction <add>, %37, %cst_22 [0] : vector<1x8x128xf32> to vector<8x128xf32>
      %39 = arith.addf %36, %38 : vector<8x128xf32>
      %c0_23 = arith.constant 0 : index
      %c0_24 = arith.constant 0 : index
      %40 = vector.load %arg8[%c0_23, %c0_24] : memref<8x128xf32, #tpu.memory_space<vmem>>, vector<8x128xf32>
      tpu.vector_store %arg8[%c0_23, %c0_24], %39 {strides = array<i32>} : memref<8x128xf32, #tpu.memory_space<vmem>>, vector<8x128xf32>,
    } else {
    }
    %c0_i32_3 = arith.constant 0 : i32
    %9 = arith.cmpi eq, %1, %c0_i32_3 : i32
    %10 = arith.extui %9 : i1 to i32
    %c0_i32_4 = arith.constant 0 : i32
    %11 = arith.cmpi ne, %10, %c0_i32_4 : i32
    scf.if %11 {
      %c0_5 = arith.constant 0 : index
      %c0_6 = arith.constant 0 : index
      %12 = vector.load %arg3[%c0_5, %c0_6] : memref<8x128xf32, #tpu.memory_space<vmem>>, vector<8x128xf32>
      %c0_7 = arith.constant 0 : index
      %c0_8 = arith.constant 0 : index
      %13 = vector.load %arg4[%c0_7, %c0_8] : memref<8x128xf32, #tpu.memory_space<vmem>>, vector<8x128xf32>
      %c0_9 = arith.constant 0 : index
      %c0_10 = arith.constant 0 : index
      %14 = vector.load %arg5[%c0_9, %c0_10] : memref<8x128xf32, #tpu.memory_space<vmem>>, vector<8x128xf32>
      %c0_11 = arith.constant 0 : index
      %c0_12 = arith.constant 0 : index
      %15 = vector.load %arg6[%c0_11, %c0_12] : memref<8x128xf32, #tpu.memory_space<vmem>>, vector<8x128xf32>
      %16 = arith.subf %12, %14 : vector<8x128xf32>
      %17 = arith.subf %13, %15 : vector<8x128xf32>
      %18 = arith.mulf %16, %16 : vector<8x128xf32>
      %19 = arith.mulf %17, %17 : vector<8x128xf32>
      %20 = arith.addf %18, %19 : vector<8x128xf32>
      %21 = arith.cmpf olt, %14, %15 : vector<8x128xf32>
      %cst = arith.constant -1.000000e+00 : f32
      %cst_13 = arith.constant 1.000000e+00 : f32
      %22 = vector.broadcast %cst : f32 to vector<8x128xf32>
      %23 = vector.broadcast %cst_13 : f32 to vector<8x128xf32>
      %24 = arith.select %21, %22, %23 : vector<8x128xi1>, vector<8x128xf32>
      %25 = arith.subf %12, %13 : vector<8x128xf32>
      %26 = arith.mulf %24, %25 : vector<8x128xf32>
      %27 = vector.broadcast %5 : f32 to vector<8x128xf32>
      %28 = arith.subf %27, %26 : vector<8x128xf32>
      %cst_14 = arith.constant 0.000000e+00 : f32
      %29 = vector.broadcast %cst_14 : f32 to vector<8x128xf32>
      %30 = arith.maximumf %29, %28 : vector<8x128xf32>
      %31 = tpu.iota {dimensions = array<i32: 0>} : vector<8x128xi32>
      %32 = tpu.iota {dimensions = array<i32: 1>} : vector<8x128xi32>
      %c128_i32 = arith.constant 128 : i32
      %33 = vector.broadcast %c128_i32 : i32 to vector<8x128xi32>
      %34 = arith.muli %31, %33 : vector<8x128xi32>
      %35 = arith.addi %34, %32 : vector<8x128xi32>
      %c8_i32 = arith.constant 8 : i32
      %36 = vector.broadcast %c8_i32 : i32 to vector<8x128xi32>
      %37 = arith.cmpi slt, %35, %36 : vector<8x128xi32>
      %cst_15 = arith.constant 0.000000e+00 : f32
      %38 = vector.broadcast %cst_15 : f32 to vector<8x128xf32>
      %39 = arith.select %37, %20, %38 : vector<8x128xi1>, vector<8x128xf32>
      %cst_16 = arith.constant 0.000000e+00 : f32
      %40 = vector.broadcast %cst_16 : f32 to vector<8x128xf32>
      %41 = arith.select %37, %30, %40 : vector<8x128xi1>, vector<8x128xf32>
      %c0_17 = arith.constant 0 : index
      %c0_18 = arith.constant 0 : index
      %42 = vector.load %arg7[%c0_17, %c0_18] : memref<8x128xf32, #tpu.memory_space<vmem>>, vector<8x128xf32>
      %43 = vector.shape_cast %39 : vector<8x128xf32> to vector<1x8x128xf32>
      %cst_19 = arith.constant dense<0.000000e+00> : vector<8x128xf32>
      %44 = vector.multi_reduction <add>, %43, %cst_19 [0] : vector<1x8x128xf32> to vector<8x128xf32>
      %45 = arith.addf %42, %44 : vector<8x128xf32>
      %c0_20 = arith.constant 0 : index
      %c0_21 = arith.constant 0 : index
      %46 = vector.load %arg7[%c0_20, %c0_21] : memref<8x128xf32, #tpu.memory_space<vmem>>, vector<8x128xf32>
      tpu.vector_store %arg7[%c0_20, %c0_21], %45 {strides = array<i32>} : memref<8x128xf32, #tpu.memory_space<vmem>>, vector<8x128xf32>,
      %c0_22 = arith.constant 0 : index
      %c0_23 = arith.constant 0 : index
      %47 = vector.load %arg8[%c0_22, %c0_23] : memref<8x128xf32, #tpu.memory_space<vmem>>, vector<8x128xf32>
      %48 = vector.shape_cast %41 : vector<8x128xf32> to vector<1x8x128xf32>
      %cst_24 = arith.constant dense<0.000000e+00> : vector<8x128xf32>
      %49 = vector.multi_reduction <add>, %48, %cst_24 [0] : vector<1x8x128xf32> to vector<8x128xf32>
      %50 = arith.addf %47, %49 : vector<8x128xf32>
      %c0_25 = arith.constant 0 : index
      %c0_26 = arith.constant 0 : index
      %51 = vector.load %arg8[%c0_25, %c0_26] : memref<8x128xf32, #tpu.memory_space<vmem>>, vector<8x128xf32>
      tpu.vector_store %arg8[%c0_25, %c0_26], %50 {strides = array<i32>} : memref<8x128xf32, #tpu.memory_space<vmem>>, vector<8x128xf32>,
    } else {
    }
    return
  }
  func.func @transform_0(%arg0: i32, %arg1: i32) -> i32 {
    %c0_i32 = arith.constant 0 : i32
    %c0_i32_0 = arith.constant 0 : i32
    return %c0_i32 : i32
  }
  func.func @transform_1(%arg0: i32, %arg1: i32) -> (i32, i32) {
    %c1_i32 = arith.constant 1 : i32
    %0 = arith.muli %arg0, %c1_i32 : i32
    %1 = arith.addi %0, %arg1 : i32
    %c0_i32 = arith.constant 0 : i32
    %c0_i32_0 = arith.constant 0 : i32
    return %1, %c0_i32 : i32, i32
  }
  func.func @transform_2(%arg0: i32, %arg1: i32) -> (i32, i32) {
    %c1_i32 = arith.constant 1 : i32
    %0 = arith.muli %arg0, %c1_i32 : i32
    %1 = arith.addi %0, %arg1 : i32
    %c0_i32 = arith.constant 0 : i32
    %c0_i32_0 = arith.constant 0 : i32
    return %1, %c0_i32 : i32, i32
  }
  func.func @transform_3(%arg0: i32, %arg1: i32) -> (i32, i32) {
    %c1_i32 = arith.constant 1 : i32
    %0 = arith.muli %arg0, %c1_i32 : i32
    %1 = arith.addi %0, %arg1 : i32
    %c0_i32 = arith.constant 0 : i32
    %c0_i32_0 = arith.constant 0 : i32
    return %1, %c0_i32 : i32, i32
  }
  func.func @transform_4(%arg0: i32, %arg1: i32) -> (i32, i32) {
    %c1_i32 = arith.constant 1 : i32
    %0 = arith.muli %arg0, %c1_i32 : i32
    %1 = arith.addi %0, %arg1 : i32
    %c0_i32 = arith.constant 0 : i32
    %c0_i32_0 = arith.constant 0 : i32
    return %1, %c0_i32 : i32, i32
  }
  func.func @transform_5(%arg0: i32, %arg1: i32) -> (i32, i32) {
    %c0_i32 = arith.constant 0 : i32
    %c0_i32_0 = arith.constant 0 : i32
    return %arg0, %c0_i32 : i32, i32
  }
  func.func @transform_6(%arg0: i32, %arg1: i32) -> (i32, i32) {
    %c0_i32 = arith.constant 0 : i32
    %c0_i32_0 = arith.constant 0 : i32
    return %arg0, %c0_i32 : i32, i32
  }
}

</mosaic_0001>

<llo_original>
// kernel: tpu_custom_call.1
$region0: #{tpu_custom_call.1}
  #allocation0 [shape = 'u32[]', space=smem, size = 0x4, offset = 0x4, fixed_abs, tag = 'smem constant byte address 0x4 - core index']
  #allocation1 [shape = 'u32[144,128]{1,0:T(1,128)}', space=vmem, size = 0x12000, scoped, tag = 'internal scratch']
  #allocation2 [shape = 'f32[1]{0:T(128)S(6)}', space=smem, size = 0x200, scoped, tag = 'scoped memory for tpu_custom_call.1']
  %s0 = inlined_call_operand.<no memory space> [shape: f32[1], index: 0, kind: input, shape index: {}]
  %s1 = inlined_call_operand.hbm [shape: f32[8,128], index: 1, kind: input, shape index: {}]
  %s2 = inlined_call_operand.hbm [shape: f32[8,128], index: 2, kind: input, shape index: {}]
  %s3 = inlined_call_operand.vmem [shape: f32[8,128], index: 3, kind: input, shape index: {}]
  %s4 = inlined_call_operand.hbm [shape: f32[8,128], index: 4, kind: input, shape index: {}]
  %s5 = inlined_call_operand.hbm [shape: f32[8,128], index: 5, kind: output, shape index: {0}]
  %s6 = inlined_call_operand.hbm [shape: f32[8,128], index: 6, kind: output, shape index: {1}]
  %7 = xla_tuple %s5, %s6
  %s8 = sld [smem:[#allocation0]]
  $region62: #{tpu_custom_call.1} parent=0
    _
  %s10 = ssub.s32 1, %s8
  %s11 = scalar_select 0, %s10, %s8
  %12 = sst [smem:[#allocation2]] %s0
  $region1: #{tpu_custom_call.1} parent=0
    #allocation3 [shape = 'u8[4096]{0}', space=vmem, size = 0x1000, scoped, tag = 'input window, operand 1, single buffered']
    #allocation4 [shape = 's32[1]{0}', space=sflag, size = 0x4, scoped, tag = 'scoped memory for tpu_custom_call.1']
    #allocation5 [shape = 's32[1]{0}', space=sflag, size = 0x4, scoped, tag = 'scoped memory for tpu_custom_call.1']
    #allocation6 [shape = 'u8[4096]{0}', space=vmem, size = 0x1000, scoped, tag = 'input window, operand 2, single buffered']
    #allocation7 [shape = 's32[1]{0}', space=sflag, size = 0x4, scoped, tag = 'scoped memory for tpu_custom_call.1']
    #allocation8 [shape = 'u8[4096]{0}', space=vmem, size = 0x1000, scoped, tag = 'input window, operand 4, single buffered']
    #allocation9 [shape = 'u8[4096]{0}', space=vmem, size = 0x1000, scoped, tag = 'output window, operand 0, single buffered']
    #allocation10 [shape = 'u8[4096]{0}', space=vmem, size = 0x1000, scoped, tag = 'output window, operand 1, single buffered']
    #allocation11 [shape = 's32[1]{0}', space=sflag, size = 0x4, scoped, tag = 'scoped memory for tpu_custom_call.1']
    %13 = vsyncpa [#allocation4], 0
    %14 = vsyncpa [#allocation7], 0
    %15 = vsyncpa [#allocation5], 0
    %16 = vsyncpa [#allocation11], 0
    // Predicated region
    $region2: #{tpu_custom_call.1} parent=1 // pred_check
      _
    $region3: #{tpu_custom_call.1} parent=1 // pred_check_branch
      %18 = sbr.rel (0) target = $region5
    $region4: #{tpu_custom_call.1} parent=1 // pred_region
      _
    $region5: #{tpu_custom_call.1} parent=1 // pred_fallthru
      _
    // Predicated region
    $region6: #{tpu_custom_call.1} parent=1 // pred_check
      _
    $region7: #{tpu_custom_call.1} parent=1 // pred_check_branch
      %20 = sbr.rel (0) target = $region9
    $region8: #{tpu_custom_call.1} parent=1 // pred_region
      %s21 = sadd.s32 0, 0
      %s23 = ssub.s32 128, 128
      %24 = vsyncadd [#allocation4], %s23
      %s25 = smul.addr %s21, 128
      %s26 = scalar_lea.hbm %s1, %s25
      %s28 = sshll.u32 [#allocation3], 4
      %s29 = int_to_ptr.vmem [resolvable:$true] %s28
      %31 = dma.hbm_to_vmem [thread:$0]  %s26, 128, %s29, [#allocation4]
    $region9: #{tpu_custom_call.1} parent=1 // pred_fallthru
      _
    // Predicated region
    $region10: #{tpu_custom_call.1} parent=1 // pred_check
      _
    $region11: #{tpu_custom_call.1} parent=1 // pred_check_branch
      %33 = sbr.rel (0) target = $region13
    $region12: #{tpu_custom_call.1} parent=1 // pred_region
      %s34 = sadd.s32 0, 0
      %s36 = ssub.s32 128, 128
      %37 = vsyncadd [#allocation7], %s36
      %s38 = smul.addr %s34, 128
      %s39 = scalar_lea.hbm %s2, %s38
      %s41 = sshll.u32 [#allocation6], 4
      %s42 = int_to_ptr.vmem [resolvable:$true] %s41
      %44 = dma.hbm_to_vmem [thread:$0]  %s39, 128, %s42, [#allocation7]
    $region13: #{tpu_custom_call.1} parent=1 // pred_fallthru
      _
    // Predicated region
    $region14: #{tpu_custom_call.1} parent=1 // pred_check
      _
    $region15: #{tpu_custom_call.1} parent=1 // pred_check_branch
      %46 = sbr.rel (0) target = $region17
    $region16: #{tpu_custom_call.1} parent=1 // pred_region
      %s47 = sadd.s32 0, 0
      %p48 = scmp.lt.s32.totalorder %s47, 0
      %s49 = scalar_select %p48, %s47, 0
      %s50 = smul.addr %s49, 8
      %s51 = scalar_lea.vmem %s3, %s50
      %s52 = sadd.s32 0, 0
    $region17: #{tpu_custom_call.1} parent=1 // pred_fallthru
      _
    // Predicated region
    $region18: #{tpu_custom_call.1} parent=1 // pred_check
      _
    $region19: #{tpu_custom_call.1} parent=1 // pred_check_branch
      %54 = sbr.rel (0) target = $region21
    $region20: #{tpu_custom_call.1} parent=1 // pred_region
      %s55 = sadd.s32 0, 0
      %s57 = ssub.s32 128, 128
      %58 = vsyncadd [#allocation7], %s57
      %s59 = smul.addr %s55, 128
      %s60 = scalar_lea.hbm %s4, %s59
      %s62 = sshll.u32 [#allocation8], 4
      %s63 = int_to_ptr.vmem [resolvable:$true] %s62
      %65 = dma.hbm_to_vmem [thread:$0]  %s60, 128, %s63, [#allocation7]
    $region21: #{tpu_custom_call.1} parent=1 // pred_fallthru
      _
    // Predicated region
    $region22: #{tpu_custom_call.1} parent=1 // pred_check
      _
    $region23: #{tpu_custom_call.1} parent=1 // pred_check_branch
      %67 = sbr.rel (0) target = $region25
    $region24: #{tpu_custom_call.1} parent=1 // pred_region
      %68 = dma.done [#allocation4], 128
    $region25: #{tpu_custom_call.1} parent=1 // pred_fallthru
      _
    // Predicated region
    $region26: #{tpu_custom_call.1} parent=1 // pred_check
      _
    $region27: #{tpu_custom_call.1} parent=1 // pred_check_branch
      %70 = sbr.rel (0) target = $region29
    $region28: #{tpu_custom_call.1} parent=1 // pred_region
      %71 = dma.done [#allocation7], 128
    $region29: #{tpu_custom_call.1} parent=1 // pred_fallthru
      _
    // Predicated region
    $region30: #{tpu_custom_call.1} parent=1 // pred_check
      _
    $region31: #{tpu_custom_call.1} parent=1 // pred_check_branch
      %73 = sbr.rel (0) target = $region33
    $region32: #{tpu_custom_call.1} parent=1 // pred_region
      %74 = dma.done [#allocation7], 128
    $region33: #{tpu_custom_call.1} parent=1 // pred_fallthru
      _
    %s75 = sadd.s32 0, 0
    %p76 = scmp.lt.s32.totalorder %s75, 0
    %s77 = scalar_select %p76, %s75, 0
    %s78 = smul.addr %s77, 8
    %s79 = scalar_lea.vmem %s3, %s78
    %s80 = sadd.s32 0, 0
    %s81 = sadd.s32 0, 0
    %s82 = sadd.s32 0, 0
    %p83 = scmp.lt.s32.totalorder %s82, 0
    %s84 = scalar_select %p83, %s82, 0
    %s85 = smul.addr %s84, 8
    %s86 = scalar_lea.vmem %s3, %s85
    %s87 = sadd.s32 0, 0
    %s88 = sadd.s32 0, 0
    %s89 = sadd.s32 0, 0
    %p90 = scmp.eq.s32.totalorder 0, 0
    // Predicated region
    $region34: #{tpu_custom_call.1} parent=1 // pred_check
      %p91 = pneg %p90
    $region35: #{tpu_custom_call.1} parent=1 // pred_check_branch
      %93 = sbr.rel (%p91) target = $region37
    $region36: #{tpu_custom_call.1} parent=1 // pred_region
      %94 = vst [vmem:[#allocation9] sm:$0xff] 0.0
      %95 = vst [vmem:[#allocation10] sm:$0xff] 0.0
    $region37: #{tpu_custom_call.1} parent=1 // pred_fallthru
      _
    %s96 = sld [smem:[#allocation2]]
    %p97 = scmp.lt.s32.totalorder %s89, 0
    // Predicated region
    $region38: #{tpu_custom_call.1} parent=1 // pred_check
      %p98 = pneg %p97
    $region39: #{tpu_custom_call.1} parent=1 // pred_check_branch
      %100 = sbr.rel (%p98) target = $region41
    $region40: #{tpu_custom_call.1} parent=1 // pred_region
      %v101 = vld [vmem:[#allocation3] sm:$0xff]
      %v102 = vld [vmem:[#allocation6] sm:$0xff]
      %v103 = vld [vmem:[%s86] sm:$0xff]
      %v104 = vld [vmem:[#allocation8] sm:$0xff]
      %v105 = vsub.f32 %v101, %v103
      %v106 = vsub.f32 %v102, %v104
      %v107 = vmul.f32 %v105, %v105
      %v108 = vmul.f32 %v106, %v106
      %v109 = vadd.f32 %v107, %v108
      %vm110 = vcmp.lt.f32.partialorder %v103, %v104
      %v111 = vsel %vm110, -1.0, 1.0
      %v112 = vsub.f32 %v101, %v102
      %v113 = vmul.f32 %v111, %v112
      %v114 = vstv %s96
      %v115 = vsub.f32 %v114, %v113
      %v116 = vmax.f32 %v115, 0.0
      %v117 = vld [vmem:[#allocation9] sm:$0xff]
      %v118 = vadd.f32 %v109, 0.0
      %v119 = vadd.f32 %v117, %v118
      %120 = vst [vmem:[#allocation9] sm:$0xff] %v119
      %v121 = vld [vmem:[#allocation10] sm:$0xff]
      %v122 = vadd.f32 %v116, 0.0
      %v123 = vadd.f32 %v121, %v122
      %124 = vst [vmem:[#allocation10] sm:$0xff] %v123
    $region41: #{tpu_custom_call.1} parent=1 // pred_fallthru
      _
    %p125 = scmp.eq.s32.totalorder %s89, 0
    // Predicated region
    $region42: #{tpu_custom_call.1} parent=1 // pred_check
      %p126 = pneg %p125
    $region43: #{tpu_custom_call.1} parent=1 // pred_check_branch
      %128 = sbr.rel (%p126) target = $region45
    $region44: #{tpu_custom_call.1} parent=1 // pred_region
      %v129 = vld [vmem:[#allocation3] sm:$0xff]
      %v130 = vld [vmem:[#allocation6] sm:$0xff]
      %v131 = vld [vmem:[%s86] sm:$0xff]
      %v132 = vld [vmem:[#allocation8] sm:$0xff]
      %v133 = vsub.f32 %v129, %v131
      %v134 = vsub.f32 %v130, %v132
      %v135 = vmul.f32 %v133, %v133
      %v136 = vmul.f32 %v134, %v134
      %v137 = vadd.f32 %v135, %v136
      %vm138 = vcmp.lt.f32.partialorder %v131, %v132
      %v139 = vsel %vm138, -1.0, 1.0
      %v140 = vsub.f32 %v129, %v130
      %v141 = vmul.f32 %v139, %v140
      %v142 = vstv %s96
      %v143 = vsub.f32 %v142, %v141
      %v144 = vmax.f32 %v143, 0.0
      %v145 = vlaneseq
      %v146 = vshrl.u32 %v145, 7
      %v147 = vlaneseq
      %v148 = vand.u32 %v147, 127
      %v149 = vmul.u32 %v146, 128
      %v150 = vadd.s32 %v149, %v148
      %vm151 = vcmp.lt.s32.totalorder %v150, 8
      %v152 = vsel %vm151, %v137, 0.0
      %v153 = vsel %vm151, %v144, 0.0
      %v154 = vld [vmem:[#allocation9] sm:$0xff]
      %v155 = vadd.f32 %v152, 0.0
      %v156 = vadd.f32 %v154, %v155
      %157 = vst [vmem:[#allocation9] sm:$0xff] %v156
      %v158 = vld [vmem:[#allocation10] sm:$0xff]
      %v159 = vadd.f32 %v153, 0.0
      %v160 = vadd.f32 %v158, %v159
      %161 = vst [vmem:[#allocation10] sm:$0xff] %v160
    $region45: #{tpu_custom_call.1} parent=1 // pred_fallthru
      _
    // Predicated region
    $region46: #{tpu_custom_call.1} parent=1 // pred_check
      _
    $region47: #{tpu_custom_call.1} parent=1 // pred_check_branch
      %163 = sbr.rel (0) target = $region49
    $region48: #{tpu_custom_call.1} parent=1 // pred_region
      %s165 = ssub.s32 128, 128
      %166 = vsyncadd [#allocation5], %s165
      %s168 = sshll.u32 [#allocation9], 4
      %s169 = int_to_ptr.vmem [resolvable:$true] %s168
      %171 = dma.vmem_to_hbm [thread:$0]  %s169, 128, %s5, [#allocation5]
    $region49: #{tpu_custom_call.1} parent=1 // pred_fallthru
      _
    // Predicated region
    $region50: #{tpu_custom_call.1} parent=1 // pred_check
      _
    $region51: #{tpu_custom_call.1} parent=1 // pred_check_branch
      %173 = sbr.rel (0) target = $region53
    $region52: #{tpu_custom_call.1} parent=1 // pred_region
      %s175 = ssub.s32 128, 128
      %176 = vsyncadd [#allocation11], %s175
      %s178 = sshll.u32 [#allocation10], 4
      %s179 = int_to_ptr.vmem [resolvable:$true] %s178
      %181 = dma.vmem_to_hbm [thread:$0]  %s179, 128, %s6, [#allocation11]
    $region53: #{tpu_custom_call.1} parent=1 // pred_fallthru
      _
    // Predicated region
    $region54: #{tpu_custom_call.1} parent=1 // pred_check
      _
    $region55: #{tpu_custom_call.1} parent=1 // pred_check_branch
      %183 = sbr.rel (0) target = $region57
    $region56: #{tpu_custom_call.1} parent=1 // pred_region
      %184 = dma.done [#allocation5], 128
    $region57: #{tpu_custom_call.1} parent=1 // pred_fallthru
      _
    // Predicated region
    $region58: #{tpu_custom_call.1} parent=1 // pred_check
      _
    $region59: #{tpu_custom_call.1} parent=1 // pred_check_branch
      %186 = sbr.rel (0) target = $region61
    $region60: #{tpu_custom_call.1} parent=1 // pred_region
      %187 = dma.done [#allocation11], 128
    $region61: #{tpu_custom_call.1} parent=1 // pred_fallthru
      _
    %188 = vsyncpa [#allocation4], 1
    %189 = vsyncpa [#allocation7], 1
    %190 = vsyncpa [#allocation5], 1
    %191 = vsyncpa [#allocation11], 1

</llo_original>
